<compile_context>
chip_gen: v5e
topology: v5e:2x2
jax: 0.10.0
libtpu: 0.0.40
codegen_flags: <defaults>
</compile_context>

<pallas_src>
import math

import numpy as np

import jax
import jax.numpy as jnp
from jax.experimental import pallas as pl
from jax.experimental.pallas import tpu as pltpu


def _embed_kernel(x_ref, w_ref, b_ref, o_ref):
    # x_ref: (TMg, G*F) bf16   folded packed feature rows
    # w_ref: (G*F, G*E) bf16   block-diagonal folded embedder weight
    # b_ref: (1,  G*E)  f32    folded (tiled) embedder bias
    # o_ref: (TMg, G*E) f32    folded embedded rows (lane-dense store)
    y = jnp.dot(x_ref[...], w_ref[...], preferred_element_type=jnp.float32)
    o_ref[...] = (y + b_ref[...]).astype(o_ref.dtype)


def _round_up(x, m):
    return ((x + m - 1) // m) * m


def _fold_factor(in_features, embed_size, max_weight_bytes=2 << 20):
    """Fold factor G: fold G consecutive rows into the lane dim so the output last
    dim becomes a multiple of 128 (unmasked stores).  Requires a VMEM-resident
    (G*F, G*E) block-diagonal weight; fall back to G=1 if that would be too big."""
    if embed_size % 128 == 0:
        return 1
    g = 128 // math.gcd(128, embed_size)
    if (g * in_features) * (g * embed_size) * 2 > max_weight_bytes:
        return 1
    return g


def _choose_tm(n_rows, in_features, embed_size, fold, out_bytes=4,
               budget_bytes=10 << 20, tm_cap=16384, target_steps=4):
    """Row-tile size in *unfolded* rows.

    Large enough to amortize the ~0.35 us/grid-step pipeline overhead (>= ~0.5-2 MB
    of HBM per step when there is enough work), small enough that double-buffered
    in/out blocks stay far inside every generation's scoped VMEM (v5e default
    16 MiB, v7x 64 MiB physical), and clamped so grid >= target_steps when there is
    enough work (two v7x TensorCores want >= 2 steps, ideally more)."""
    align = max(16 * fold, 16)                       # bf16 sublane pack x fold
    bytes_per_row = 2 * in_features + out_bytes * embed_size
    tm = min(tm_cap, int(budget_bytes // (2 * bytes_per_row)))   # 2x: double buffer
    tm = max(align, (tm // align) * align)
    rows_al = _round_up(max(n_rows, 1), align)
    if rows_al <= tm:
        return rows_al                               # one full-size block, grid == 1
    per_step = _round_up(pl.cdiv(n_rows, target_steps), align)
    floor_tm = min(rows_al, _round_up(4096, align))  # never shrink to tiny tiles
    return min(tm, max(per_step, floor_tm))


def embed_rows(x_rows, weight, bias, out_dtype=jnp.float32):
    """Pallas hot path: y = x @ W.T + b over (already packed) rows.

    x_rows: (M, F) float, weight: (E, F) in torch Linear convention, bias: (E,).
    Returns (M, E) `out_dtype`.
    """
    M, F = x_rows.shape
    E = weight.shape[0]
    G = _fold_factor(F, E)
    TM = _choose_tm(M, F, E, G, out_bytes=jnp.dtype(out_dtype).itemsize)
    grid = pl.cdiv(M, TM)
    M_pad = grid * TM

    xb = x_rows.astype(jnp.bfloat16)
    if M_pad != M:
        xb = jnp.pad(xb, ((0, M_pad - M), (0, 0)))
    wt = jnp.transpose(weight).astype(jnp.bfloat16)              # (F, E)

    if G > 1:
        # Fold G consecutive rows into lanes: exact same arithmetic (off-diagonal
        # weight blocks are zero), but all blocks become lane-dense.
        xb = xb.reshape(M_pad // G, G * F)
        wt = jnp.kron(jnp.eye(G, dtype=wt.dtype), wt)            # (G*F, G*E)
        bb = jnp.tile(bias.astype(jnp.float32), G).reshape(1, G * E)
    else:
        bb = bias.astype(jnp.float32).reshape(1, E)

    TMg, GF, GE = TM // G, G * F, G * E
    out = pl.pallas_call(
        _embed_kernel,
        out_shape=jax.ShapeDtypeStruct((M_pad // G, GE), out_dtype),
        grid_spec=pltpu.PrefetchScalarGridSpec(
            num_scalar_prefetch=0,
            grid=(grid,),
            in_specs=[
                pl.BlockSpec((TMg, GF), lambda i: (i, 0)),       # folded row tile
                pl.BlockSpec((GF, GE), lambda i: (0, 0)),        # weight, resident
                pl.BlockSpec((1, GE), lambda i: (0, 0)),         # bias, resident
            ],
            out_specs=pl.BlockSpec((TMg, GE), lambda i: (i, 0)),
        ),
        compiler_params=pltpu.CompilerParams(
            dimension_semantics=("parallel",),
            vmem_limit_bytes=32 << 20,     # explicit: v5e scoped default is 16 MiB
        ),
    )(xb, wt, bb)
    return out.reshape(M_pad, E)[:M]


def _packed_gather_plan(lengths_host, max_len):
    """Host-side pack_padded_sequence plan from *static* lengths.

    Returns (gather_rows into the concatenated input, batch_sizes, sorted_indices,
    unsorted_indices), matching torch.nn.utils.rnn.pack_padded_sequence with
    batch_first=True, enforce_sorted=False (stable descending length sort)."""
    lengths = np.asarray(lengths_host, dtype=np.int32)
    sorted_indices = np.argsort(-lengths, kind="stable").astype(np.int32)
    unsorted_indices = np.argsort(sorted_indices).astype(np.int32)
    sorted_lens = lengths[sorted_indices]
    t_idx = np.arange(max_len, dtype=np.int32)
    valid = sorted_lens[None, :] > t_idx[:, None]            # (T, B) time-major
    batch_sizes = valid.sum(axis=1).astype(np.int32)
    tt, bb = np.nonzero(valid)                               # packed row order
    offsets = np.zeros(len(lengths), dtype=np.int32)
    offsets[1:] = np.cumsum(lengths)[:-1]                    # row offsets in concat
    gather_rows = (offsets[sorted_indices[bb]] + tt).astype(np.int32)
    return gather_rows, batch_sizes, sorted_indices, unsorted_indices


def task2tensor_forward(encoded_list, weight, bias, pad_symbol=0.0):
    """Task2Tensor.forward over a list of encoded task tensors (L_i, F).

    Returns (data, batch_sizes, sorted_indices, unsorted_indices) - the fields of
    the PackedSequence.  `pad_symbol` only affects padded positions in the
    reference module, and pack_padded_sequence drops those, so the packed output
    does not depend on it (kept for API compatibility).  Lengths come from static
    array shapes, so the packed length / gather plan is built on the host."""
    del pad_symbol
    lengths_host = [int(x.shape[0]) for x in encoded_list]
    T = max(lengths_host)

    gather_rows, batch_sizes, sorted_idx, unsorted_idx = _packed_gather_plan(
        lengths_host, T)

    x_cat = jnp.concatenate([jnp.asarray(x) for x in encoded_list], axis=0)
    x_packed = jnp.take(x_cat, jnp.asarray(gather_rows), axis=0)     # (total, F)

    data = embed_rows(x_packed, weight, bias)                        # (total, E)
    return (data, jnp.asarray(batch_sizes), jnp.asarray(sorted_idx),
            jnp.asarray(unsorted_idx))


if __name__ == "__main__":
    key = jax.random.PRNGKey(0)
    in_features, embed_size = 32, 16
    lengths_host = [8, 5, 7]                 # 3 tasks, variable-length encodings

    keys = jax.random.split(key, 2 + len(lengths_host))
    weight = jax.random.normal(keys[0], (embed_size, in_features), jnp.float32) * 0.1
    bias = jax.random.normal(keys[1], (embed_size,), jnp.float32) * 0.1
    encoded = [
        jax.random.normal(keys[2 + i], (L, in_features), jnp.float32)
        for i, L in enumerate(lengths_host)
    ]

    data, batch_sizes, sorted_idx, unsorted_idx = task2tensor_forward(
        encoded, weight, bias, pad_symbol=0.0)
    jax.block_until_ready(data)

    # Reference in plain JAX: same bf16-input / f32-accumulate matmul as the kernel.
    w_bf = weight.astype(jnp.bfloat16)
    ref_emb = [
        jnp.dot(x.astype(jnp.bfloat16), w_bf.T,
                preferred_element_type=jnp.float32) + bias
        for x in encoded
    ]
    order = [int(i) for i in sorted_idx]
    ref_rows = []
    for t in range(max(lengths_host)):
        for b in order:
            if lengths_host[b] > t:
                ref_rows.append(ref_emb[b][t])
    ref_data = jnp.stack(ref_rows)

    assert data.shape == (sum(lengths_host), embed_size)
    assert jnp.allclose(data, ref_data, atol=2e-3, rtol=2e-3), \
        float(jnp.max(jnp.abs(data - ref_data)))
    assert int(batch_sizes.sum()) == sum(lengths_host)
    exp_bs = [sum(1 for L in lengths_host if L > t) for t in range(max(lengths_host))]
    assert [int(v) for v in batch_sizes] == exp_bs
    assert [int(unsorted_idx[i]) for i in order] == list(range(len(order)))

    print("KERNEL_OK")
</pallas_src>

<mosaic_0001>
module attributes {stable_mosaic.version = 11 : i64} {
  func.func @_embed_kernel(%arg0: i32, %arg1: memref<16x256xbf16, #tpu.memory_space<vmem>>, %arg2: memref<256x128xbf16, #tpu.memory_space<vmem>>, %arg3: memref<1x128xf32, #tpu.memory_space<vmem>>, %arg4: memref<16x128xf32, #tpu.memory_space<vmem>>) attributes {dimension_semantics = [#tpu.dimension_semantics<parallel>], iteration_bounds = array<i64: 1>, scalar_prefetch = 0 : i64, scratch_operands = 0 : i64, tpu.core_type = #tpu.core_type<tc>, window_params = [{transform_indices = @transform_0, window_bounds = array<i64: 16, 256>}, {pipeline_mode = #tpu.pipeline_mode<synchronous>, transform_indices = @transform_1, window_bounds = array<i64: 256, 128>}, {pipeline_mode = #tpu.pipeline_mode<synchronous>, transform_indices = @transform_2, window_bounds = array<i64: 1, 128>}, {transform_indices = @transform_3, window_bounds = array<i64: 16, 128>}]} {
    %c0 = arith.constant 0 : index
    %c0_0 = arith.constant 0 : index
    %0 = vector.load %arg1[%c0, %c0_0] : memref<16x256xbf16, #tpu.memory_space<vmem>>, vector<16x256xbf16>
    %c0_1 = arith.constant 0 : index
    %c0_2 = arith.constant 0 : index
    %1 = vector.load %arg2[%c0_1, %c0_2] : memref<256x128xbf16, #tpu.memory_space<vmem>>, vector<256x128xbf16>
    %cst = arith.constant dense<0.000000e+00> : vector<16x128xf32>
    %2 = tpu.matmul %0, %1, %cst {dimension_numbers = #tpu.dot_dimension_numbers<[1], [0], [0], [1], [0, 0, 1, 1], [], []>} : vector<16x256xbf16>, vector<256x128xbf16>, vector<16x128xf32> -> vector<16x128xf32>
    %c0_3 = arith.constant 0 : index
    %c0_4 = arith.constant 0 : index
    %3 = vector.load %arg3[%c0_3, %c0_4] : memref<1x128xf32, #tpu.memory_space<vmem>>, vector<1x128xf32>
    %4 = vector.broadcast %3 : vector<1x128xf32> to vector<16x128xf32>
    %5 = arith.addf %2, %4 : vector<16x128xf32>
    %c0_5 = arith.constant 0 : index
    %c0_6 = arith.constant 0 : index
    %6 = vector.load %arg4[%c0_5, %c0_6] : memref<16x128xf32, #tpu.memory_space<vmem>>, vector<16x128xf32>
    tpu.vector_store %arg4[%c0_5, %c0_6], %5 {strides = array<i32>} : memref<16x128xf32, #tpu.memory_space<vmem>>, vector<16x128xf32>,
    return
  }
  func.func @transform_0(%arg0: i32) -> (i32, i32) {
    %c0_i32 = arith.constant 0 : i32
    %c0_i32_0 = arith.constant 0 : i32
    return %arg0, %c0_i32 : i32, i32
  }
  func.func @transform_1(%arg0: i32) -> (i32, i32) {
    %c0_i32 = arith.constant 0 : i32
    %c0_i32_0 = arith.constant 0 : i32
    %c0_i32_1 = arith.constant 0 : i32
    return %c0_i32, %c0_i32_0 : i32, i32
  }
  func.func @transform_2(%arg0: i32) -> (i32, i32) {
    %c0_i32 = arith.constant 0 : i32
    %c0_i32_0 = arith.constant 0 : i32
    %c0_i32_1 = arith.constant 0 : i32
    return %c0_i32, %c0_i32_0 : i32, i32
  }
  func.func @transform_3(%arg0: i32) -> (i32, i32) {
    %c0_i32 = arith.constant 0 : i32
    %c0_i32_0 = arith.constant 0 : i32
    return %arg0, %c0_i32 : i32, i32
  }
}

</mosaic_0001>

<llo_original>
// kernel: tpu_custom_call.1
$region0: #{tpu_custom_call.1}
  #allocation0 [shape = 'u32[]', space=smem, size = 0x4, offset = 0x4, fixed_abs, tag = 'smem constant byte address 0x4 - core index']
  #allocation1 [shape = 'u32[72,128]{1,0:T(1,128)}', space=vmem, size = 0x9000, scoped, tag = 'internal scratch']
  %s0 = inlined_call_operand.hbm [shape: bf16[16,256], index: 0, kind: input, shape index: {}]
  %s1 = inlined_call_operand.hbm [shape: bf16[256,128], index: 1, kind: input, shape index: {}]
  %s2 = inlined_call_operand.vmem [shape: f32[1,128], index: 2, kind: input, shape index: {}]
  %s3 = inlined_call_operand.hbm [shape: f32[16,128], index: 3, kind: output, shape index: {}]
  %s4 = sld [smem:[#allocation0]]
  $region30: #{tpu_custom_call.1} parent=0
    _
  %s6 = ssub.s32 1, %s4
  %s7 = scalar_select 0, %s6, %s4
  $region1: #{tpu_custom_call.1} parent=0
    #allocation2 [shape = 'u8[8192]{0}', space=vmem, size = 0x2000, scoped, tag = 'input window, operand 0, single buffered']
    #allocation3 [shape = 's32[1]{0}', space=sflag, size = 0x4, scoped, tag = 'scoped memory for tpu_custom_call.1']
    #allocation4 [shape = 's32[1]{0}', space=sflag, size = 0x4, scoped, tag = 'scoped memory for tpu_custom_call.1']
    #allocation5 [shape = 'u8[65536]{0}', space=vmem, size = 0x10000, scoped, tag = 'input window, operand 1, single buffered']
    #allocation6 [shape = 's32[1]{0}', space=sflag, size = 0x4, scoped, tag = 'scoped memory for tpu_custom_call.1']
    #allocation7 [shape = 'u8[8192]{0}', space=vmem, size = 0x2000, scoped, tag = 'output window, operand 0, single buffered']
    %8 = vsyncpa [#allocation3], 0
    %9 = vsyncpa [#allocation6], 0
    %10 = vsyncpa [#allocation4], 0
    // Predicated region
    $region2: #{tpu_custom_call.1} parent=1 // pred_check
      _
    $region3: #{tpu_custom_call.1} parent=1 // pred_check_branch
      %12 = sbr.rel (0) target = $region5
    $region4: #{tpu_custom_call.1} parent=1 // pred_region
      %14 = vsyncadd [#allocation3], 0
      %s15 = sshll.u32 %s0, 4
      %s16 = int_to_ptr.hbm [resolvable:$true] %s15
      %s17 = sshll.u32 [#allocation2], 4
      %s18 = int_to_ptr.vmem [resolvable:$true] %s17
      %23 = dma.hbm_to_vmem [thread:$0]  %s16, 256, %s18, [#allocation3], 128, 128, 8
    $region5: #{tpu_custom_call.1} parent=1 // pred_fallthru
      _
    // Predicated region
    $region6: #{tpu_custom_call.1} parent=1 // pred_check
      _
    $region7: #{tpu_custom_call.1} parent=1 // pred_check_branch
      %25 = sbr.rel (0) target = $region9
    $region8: #{tpu_custom_call.1} parent=1 // pred_region
      %27 = vsyncadd [#allocation6], 0
      %s28 = sshll.u32 %s1, 4
      %s29 = int_to_ptr.hbm [resolvable:$true] %s28
      %s30 = sshll.u32 [#allocation5], 4
      %s31 = int_to_ptr.vmem [resolvable:$true] %s30
      %36 = dma.hbm_to_vmem [thread:$0]  %s29, 2048, %s31, [#allocation6], 64, 64, 4
    $region9: #{tpu_custom_call.1} parent=1 // pred_fallthru
      _
    // Predicated region
    $region10: #{tpu_custom_call.1} parent=1 // pred_check
      _
    $region11: #{tpu_custom_call.1} parent=1 // pred_check_branch
      %38 = sbr.rel (0) target = $region13
    $region12: #{tpu_custom_call.1} parent=1 // pred_region
      _
    $region13: #{tpu_custom_call.1} parent=1 // pred_fallthru
      _
    // Predicated region
    $region14: #{tpu_custom_call.1} parent=1 // pred_check
      _
    $region15: #{tpu_custom_call.1} parent=1 // pred_check_branch
      %40 = sbr.rel (0) target = $region17
    $region16: #{tpu_custom_call.1} parent=1 // pred_region
      %42 = dma.done [#allocation3], 256
    $region17: #{tpu_custom_call.1} parent=1 // pred_fallthru
      _
    // Predicated region
    $region18: #{tpu_custom_call.1} parent=1 // pred_check
      _
    $region19: #{tpu_custom_call.1} parent=1 // pred_check_branch
      %44 = sbr.rel (0) target = $region21
    $region20: #{tpu_custom_call.1} parent=1 // pred_region
      %46 = dma.done [#allocation6], 2048
    $region21: #{tpu_custom_call.1} parent=1 // pred_fallthru
      _
    %v47 = vld [vmem:[#allocation2] sm:$0xff]
    %v48 = vld [vmem:[#allocation2 + $0x8] sm:$0xff]
    %v49 = vld [vmem:[#allocation5] sm:$0xf]
    %v50 = vld [vmem:[#allocation5 + $0x4] sm:$0xf]
    %v51 = vld [vmem:[#allocation5 + $0x8] sm:$0xf]
    %v52 = vld [vmem:[#allocation5 + $0xc] sm:$0xf]
    %v53 = vld [vmem:[#allocation5 + $0x10] sm:$0xf]
    %v54 = vld [vmem:[#allocation5 + $0x14] sm:$0xf]
    %v55 = vld [vmem:[#allocation5 + $0x18] sm:$0xf]
    %v56 = vld [vmem:[#allocation5 + $0x1c] sm:$0xf]
    %v57 = vld [vmem:[#allocation5 + $0x20] sm:$0xf]
    %v58 = vld [vmem:[#allocation5 + $0x24] sm:$0xf]
    %v59 = vld [vmem:[#allocation5 + $0x28] sm:$0xf]
    %v60 = vld [vmem:[#allocation5 + $0x2c] sm:$0xf]
    %v61 = vld [vmem:[#allocation5 + $0x30] sm:$0xf]
    %v62 = vld [vmem:[#allocation5 + $0x34] sm:$0xf]
    %v63 = vld [vmem:[#allocation5 + $0x38] sm:$0xf]
    %v64 = vld [vmem:[#allocation5 + $0x3c] sm:$0xf]
    %v65 = vld [vmem:[#allocation5 + $0x40] sm:$0xf]
    %v66 = vld [vmem:[#allocation5 + $0x44] sm:$0xf]
    %v67 = vld [vmem:[#allocation5 + $0x48] sm:$0xf]
    %v68 = vld [vmem:[#allocation5 + $0x4c] sm:$0xf]
    %v69 = vld [vmem:[#allocation5 + $0x50] sm:$0xf]
    %v70 = vld [vmem:[#allocation5 + $0x54] sm:$0xf]
    %v71 = vld [vmem:[#allocation5 + $0x58] sm:$0xf]
    %v72 = vld [vmem:[#allocation5 + $0x5c] sm:$0xf]
    %v73 = vld [vmem:[#allocation5 + $0x60] sm:$0xf]
    %v74 = vld [vmem:[#allocation5 + $0x64] sm:$0xf]
    %v75 = vld [vmem:[#allocation5 + $0x68] sm:$0xf]
    %v76 = vld [vmem:[#allocation5 + $0x6c] sm:$0xf]
    %v77 = vld [vmem:[#allocation5 + $0x70] sm:$0xf]
    %v78 = vld [vmem:[#allocation5 + $0x74] sm:$0xf]
    %v79 = vld [vmem:[#allocation5 + $0x78] sm:$0xf]
    %v80 = vld [vmem:[#allocation5 + $0x7c] sm:$0xf]
    %v81 = vld [vmem:[%s2] sm:$0x1]
    %v83 = vperm.slane %v81, 0
    %v87 = vunpack.c.l.b16 %v47
    %v88 = vunpack.c.h.b16 %v47
    %v89 = vunpack.c.l.b16 %v48
    %v90 = vunpack.c.h.b16 %v48
    %v91 = vpack.c.b16 %v89, %v87
    %v92 = vpack.c.b16 %v90, %v88
    %v127 = vunpack.c.l.b16 %v49
    %v128 = vunpack.c.l.b16 %v50
    %v129 = vunpack.c.l.b16 %v51
    %v130 = vunpack.c.l.b16 %v52
    %v131 = vunpack.c.l.b16 %v53
    %v132 = vunpack.c.l.b16 %v54
    %v133 = vunpack.c.l.b16 %v55
    %v134 = vunpack.c.l.b16 %v56
    %v135 = vunpack.c.l.b16 %v57
    %v136 = vunpack.c.l.b16 %v58
    %v137 = vunpack.c.l.b16 %v59
    %v138 = vunpack.c.l.b16 %v60
    %v139 = vunpack.c.l.b16 %v61
    %v140 = vunpack.c.l.b16 %v62
    %v141 = vunpack.c.l.b16 %v63
    %v142 = vunpack.c.l.b16 %v64
    %v143 = vunpack.c.l.b16 %v65
    %v144 = vunpack.c.l.b16 %v66
    %v145 = vunpack.c.l.b16 %v67
    %v146 = vunpack.c.l.b16 %v68
    %v147 = vunpack.c.l.b16 %v69
    %v148 = vunpack.c.l.b16 %v70
    %v149 = vunpack.c.l.b16 %v71
    %v150 = vunpack.c.l.b16 %v72
    %v151 = vunpack.c.l.b16 %v73
    %v152 = vunpack.c.l.b16 %v74
    %v153 = vunpack.c.l.b16 %v75
    %v154 = vunpack.c.l.b16 %v76
    %v155 = vunpack.c.l.b16 %v77
    %v156 = vunpack.c.l.b16 %v78
    %v157 = vunpack.c.l.b16 %v79
    %v158 = vunpack.c.l.b16 %v80
    %v159 = vpack.c.b16 %v128, %v127
    %v160 = vpack.c.b16 %v130, %v129
    %v161 = vpack.c.b16 %v132, %v131
    %v162 = vpack.c.b16 %v134, %v133
    %v163 = vpack.c.b16 %v136, %v135
    %v164 = vpack.c.b16 %v138, %v137
    %v165 = vpack.c.b16 %v140, %v139
    %v166 = vpack.c.b16 %v142, %v141
    %v167 = vpack.c.b16 %v144, %v143
    %v168 = vpack.c.b16 %v146, %v145
    %v169 = vpack.c.b16 %v148, %v147
    %v170 = vpack.c.b16 %v150, %v149
    %v171 = vpack.c.b16 %v152, %v151
    %v172 = vpack.c.b16 %v154, %v153
    %v173 = vpack.c.b16 %v156, %v155
    %v174 = vpack.c.b16 %v158, %v157
    %191 = vmatpush.bf16.msra.mxu0 %v166
    %192 = vmatpush.bf16.msra.mxu0 %v165
    %193 = vmatpush.bf16.msra.mxu0 %v164
    %194 = vmatpush.bf16.msra.mxu0 %v163
    %195 = vmatpush.bf16.msra.mxu0 %v162
    %196 = vmatpush.bf16.msra.mxu0 %v161
    %197 = vmatpush.bf16.msra.mxu0 %v160
    %198 = vmatpush.bf16.msra.mxu0 %v159
    %199 = vmatmul.bf16.gmra.mxu0 %v91
    %v200 = vpop.f32.mrf.mxu0
    %v201 = vadd.f32 %v83, %v200
    %v202 = vpop.f32.mrf.mxu0
    %v203 = vadd.f32 %v83, %v202
    %204 = vdwg.mxu0
    %205 = vmatpush.bf16.msra.mxu0 %v174
    %206 = vmatpush.bf16.msra.mxu0 %v173
    %207 = vmatpush.bf16.msra.mxu0 %v172
    %208 = vmatpush.bf16.msra.mxu0 %v171
    %209 = vmatpush.bf16.msra.mxu0 %v170
    %210 = vmatpush.bf16.msra.mxu0 %v169
    %211 = vmatpush.bf16.msra.mxu0 %v168
    %212 = vmatpush.bf16.msra.mxu0 %v167
    %213 = vmatmul.bf16.gmra.mxu0 %v92
    %v214 = vpop.f32.mrf.mxu0
    %v215 = vadd.f32 %v201, %v214
    %v216 = vpop.f32.mrf.mxu0
    %v217 = vadd.f32 %v203, %v216
    %218 = vdwg.mxu0
    %219 = vst [vmem:[#allocation7] sm:$0xff] %v215
    %220 = vst [vmem:[#allocation7 + $0x8] sm:$0xff] %v217
    // Predicated region
    $region22: #{tpu_custom_call.1} parent=1 // pred_check
      _
    $region23: #{tpu_custom_call.1} parent=1 // pred_check_branch
      %222 = sbr.rel (0) target = $region25
    $region24: #{tpu_custom_call.1} parent=1 // pred_region
      %224 = vsyncadd [#allocation4], 0
      %s225 = sshll.u32 [#allocation7], 4
      %s226 = int_to_ptr.vmem [resolvable:$true] %s225
      %s227 = sshll.u32 %s3, 4
      %s228 = int_to_ptr.hbm [resolvable:$true] %s227
      %233 = dma.vmem_to_hbm [thread:$0]  %s226, 256, %s228, [#allocation4], 128, 128, 8
    $region25: #{tpu_custom_call.1} parent=1 // pred_fallthru
      _
    // Predicated region
    $region26: #{tpu_custom_call.1} parent=1 // pred_check
      _
    $region27: #{tpu_custom_call.1} parent=1 // pred_check_branch
      %235 = sbr.rel (0) target = $region29
    $region28: #{tpu_custom_call.1} parent=1 // pred_region
      %237 = dma.done [#allocation4], 256
    $region29: #{tpu_custom_call.1} parent=1 // pred_fallthru
      _
    %238 = vsyncpa [#allocation3], 1
    %239 = vsyncpa [#allocation6], 1
    %240 = vsyncpa [#allocation4], 1

</llo_original>
